<compile_context>
chip_gen: v7x
topology: tpu7x:2x2x1
jax: 0.10.0
libtpu: 0.0.40
codegen_flags: <defaults>
</compile_context>

<pallas_src>
import functools

import jax
import jax.numpy as jnp
from jax.experimental import pallas as pl
from jax.experimental.pallas import tpu as pltpu

_LANES = 128
_SUBLANES = 8


def _round_up(x, m):
    return (x + m - 1) // m * m


def _vq_kernel(x_ref, w_ref, w2h_ref, q_ref, idx_ref, sse_ref, *,
               n_valid, tile_n, has_tail):
    # x_ref: (TN, D), w_ref: (Kp, D), w2h_ref: (1, Kp) = 0.5*||w||^2
    x = x_ref[...].astype(jnp.float32)
    w = w_ref[...].astype(jnp.float32)
    w2h = w2h_ref[...]                                             # (1, Kp)

    # score[n, k] = 0.5*||w_k||^2 - x_n . w_k   (argmin-equivalent; the 0.5 is
    # pre-folded into w2h so no elementwise multiply over the (TN, Kp) slab).
    xwT = jnp.dot(x, w.T, preferred_element_type=jnp.float32)     # (TN, Kp)
    score = w2h - xwT

    # First-minimum tie-breaking argmin over the codebook axis (like torch).
    idx = jnp.argmin(score, axis=1).astype(jnp.int32)             # (TN,)
    idx_ref[...] = idx.reshape(idx_ref.shape)                     # lane-dense

    # Embedding lookup as one-hot @ W (MXU-friendly gather).  The iota is a
    # single (1, Kp) lane vector, broadcast in the compare.
    # NOTE: Mosaic's default f32 matmul path reproduces the codebook rows to
    # well under the 1e-5 tolerance checked below; pin
    # precision=jax.lax.Precision.HIGHEST here if bit-exact rows are required.
    iota_k = jax.lax.broadcasted_iota(jnp.int32, (1, score.shape[1]), 1)
    onehot = (iota_k == idx[:, None]).astype(jnp.float32)         # (TN, Kp)
    q = jnp.dot(onehot, w, preferred_element_type=jnp.float32)    # (TN, D)
    q_ref[...] = q.astype(q_ref.dtype)

    # Per-tile partial sum of squared errors.  Only the final (partial) tile
    # can carry rows past N; those rows hold unspecified VMEM, so gate with
    # jnp.where (mask-multiply would propagate NaN*0 = NaN into the loss).
    diff = q - x
    if not has_tail:
        sse_ref[...] = jnp.broadcast_to(jnp.sum(diff * diff), sse_ref.shape)
    else:
        is_last = pl.program_id(0) == pl.num_programs(0) - 1

        @pl.when(jnp.logical_not(is_last))
        def _():
            sse_ref[...] = jnp.broadcast_to(jnp.sum(diff * diff), sse_ref.shape)

        @pl.when(is_last)
        def _():
            row0 = pl.program_id(0) * tile_n
            rows = row0 + jax.lax.broadcasted_iota(jnp.int32, (tile_n, 1), 0)
            d = jnp.where(rows < n_valid, diff, 0.0)
            sse_ref[...] = jnp.broadcast_to(jnp.sum(d * d), sse_ref.shape)


def vector_quantizer_forward(x, codebook, commitment_cost, *, tile_n=256):
    """Replicates VectorQuantizer.forward (forward values only).

    Args:
      x:        [N, D] float32 flat activations.
      codebook: [K, D] float32 embedding table (nn.Embedding.weight).
      tile_n:   rows per grid step (multiple of 8).  256 is a good default on
                v5e/v6e/v7x; consider 512 on v6e/v7x when K*D is small, and
                shrink (or tile K in-kernel) when the VMEM estimate below
                approaches the per-TC budget (v7x: 64 MiB physical,
                v5e: 16 MiB scoped by default).

    Returns:
      (quantized [N, D] f32, loss scalar f32, encoding_indices [N] int32)
    """
    N, D = x.shape
    K, D2 = codebook.shape
    assert D == D2

    # Clamp tile_n so tiny inputs get a single exact block; large N keeps the
    # default for MXU / pipeline occupancy.
    tile_n = max(_SUBLANES, min(tile_n, _round_up(N, _SUBLANES)))
    grid_n = pl.cdiv(N, tile_n)
    has_tail = (N % tile_n) != 0

    # Pad the codebook axis to a lane multiple once (lane-dense ||w||^2 and
    # score slab, MXU-aligned K).  Padded rows get a huge half-norm so they can
    # never win the argmin; their zero rows keep the one-hot gather exact.
    K_pad = _round_up(K, _LANES)
    w2_half = 0.5 * jnp.sum(codebook.astype(jnp.float32) ** 2, axis=1)[None, :]
    if K_pad != K:
        codebook = jnp.pad(codebook, ((0, K_pad - K), (0, 0)))
        w2_half = jnp.pad(w2_half, ((0, 0), (0, K_pad - K)),
                          constant_values=1e30)
    w2_half = w2_half.astype(jnp.float32)

    kernel = functools.partial(_vq_kernel, n_valid=N, tile_n=tile_n,
                               has_tail=has_tail)

    # VMEM budget estimate (lane/sublane-padded, double-buffered tiles plus the
    # elementwise score/onehot slabs), used to set an explicit scoped limit.
    d_lane = _round_up(D, _LANES)
    vmem_est = (4 * tile_n * d_lane * 4          # x + quantized, 2x buffered
                + 2 * K_pad * d_lane * 4         # codebook, 2x buffered
                + 2 * _SUBLANES * K_pad * 4      # 0.5*||w||^2
                + 2 * _SUBLANES * tile_n * 4     # indices
                + 2 * _SUBLANES * _LANES * 4     # sse partials
                + 4 * tile_n * K_pad * 4         # score/onehot intermediates
                + (2 << 20))                     # margin
    vmem_limit = int(min(64 << 20, max(32 << 20, 2 * vmem_est)))

    cost = pl.CostEstimate(
        flops=int(4 * N * K_pad * D + 6 * N * K_pad + 2 * N * D),
        transcendentals=0,
        bytes_accessed=int(4 * (2 * N * D + K_pad * D + K_pad + N
                                + grid_n * _LANES)),
    )

    quantized, idx_out, sse_parts = pl.pallas_call(
        kernel,
        out_shape=(
            jax.ShapeDtypeStruct((N, D), jnp.float32),
            jax.ShapeDtypeStruct((grid_n, 1, tile_n), jnp.int32),
            jax.ShapeDtypeStruct((grid_n, 1, _LANES), jnp.float32),
        ),
        grid_spec=pltpu.PrefetchScalarGridSpec(
            num_scalar_prefetch=0,
            grid=(grid_n,),
            in_specs=[
                pl.BlockSpec((tile_n, D), lambda i: (i, 0)),    # x tile
                pl.BlockSpec((K_pad, D), lambda i: (0, 0)),     # full codebook
                pl.BlockSpec((1, K_pad), lambda i: (0, 0)),     # 0.5*||w||^2
            ],
            out_specs=[
                pl.BlockSpec((tile_n, D), lambda i: (i, 0)),        # quantized
                pl.BlockSpec((1, 1, tile_n), lambda i: (i, 0, 0)),  # indices
                pl.BlockSpec((1, 1, _LANES), lambda i: (i, 0, 0)),  # sse part
            ],
        ),
        compiler_params=pltpu.CompilerParams(
            # No cross-step carry (sse is per-tile partials) -> N axis can be
            # sharded across both TensorCores on v7x.
            dimension_semantics=("parallel",),
            vmem_limit_bytes=vmem_limit,
        ),
        cost_estimate=cost,
    )(x, codebook, w2_half)

    indices = idx_out.reshape(-1)[:N]

    # F.mse_loss: mean over all elements.  q_latent_loss and e_latent_loss are
    # numerically identical in the forward pass.
    sse = jnp.sum(sse_parts[:, 0, 0])
    mse = sse / jnp.float32(N * D)
    loss = mse + commitment_cost * mse

    # Straight-through estimator: forward value is exactly `quantized`.
    return quantized, loss, indices


if __name__ == "__main__":
    embedding_dim = 16
    num_embeddings = 64
    commitment_cost = 0.25

    key = jax.random.PRNGKey(0)
    kx, kw = jax.random.split(key)
    # batch=2, 4x4 spatial positions, D=16 (already permuted so D is last).
    x4 = jax.random.normal(kx, (2, 4, 4, embedding_dim), dtype=jnp.float32)
    x = x4.reshape(-1, embedding_dim)            # [N, D], N = 32
    # nn.Embedding default init: weight ~ N(0, 1)
    codebook = jax.random.normal(kw, (num_embeddings, embedding_dim),
                                 dtype=jnp.float32)

    quantized, loss, indices = vector_quantizer_forward(
        x, codebook, commitment_cost)
    quantized4 = quantized.reshape(x4.shape)     # mirrors quantized.view_as(x)
    jax.block_until_ready((quantized4, loss, indices))

    # Sanity checks against a pure-JAX reference (torch-formula distances).
    dist_ref = (jnp.sum(x ** 2, axis=1, keepdims=True)
                + jnp.sum(codebook ** 2, axis=1)
                - 2.0 * x @ codebook.T)
    idx_ref = jnp.argmin(dist_ref, axis=1)
    q_ref = codebook[idx_ref]
    mse_ref = jnp.mean((q_ref - x) ** 2)
    loss_ref = mse_ref + commitment_cost * mse_ref

    assert jnp.array_equal(indices, idx_ref.astype(jnp.int32))
    assert jnp.allclose(quantized, q_ref, atol=1e-5, rtol=1e-5)
    assert jnp.allclose(loss, loss_ref, atol=1e-5, rtol=1e-5)

    print("KERNEL_OK")
</pallas_src>

<mosaic_0001>
module attributes {stable_mosaic.version = 11 : i64} {
  func.func @_vq_kernel(%arg0: i32, %arg1: memref<32x16xf32, #tpu.memory_space<vmem>>, %arg2: memref<128x16xf32, #tpu.memory_space<vmem>>, %arg3: memref<1x128xf32, #tpu.memory_space<vmem>>, %arg4: memref<32x16xf32, #tpu.memory_space<vmem>>, %arg5: memref<1x1x32xi32, #tpu.memory_space<vmem>>, %arg6: memref<1x1x128xf32, #tpu.memory_space<vmem>>) attributes {dimension_semantics = [#tpu.dimension_semantics<parallel>], iteration_bounds = array<i64: 1>, scalar_prefetch = 0 : i64, scratch_operands = 0 : i64, tpu.core_type = #tpu.core_type<tc>, window_params = [{transform_indices = @transform_0, window_bounds = array<i64: 32, 16>}, {pipeline_mode = #tpu.pipeline_mode<synchronous>, transform_indices = @transform_1, window_bounds = array<i64: 128, 16>}, {pipeline_mode = #tpu.pipeline_mode<synchronous>, transform_indices = @transform_2, window_bounds = array<i64: 1, 128>}, {transform_indices = @transform_3, window_bounds = array<i64: 32, 16>}, {transform_indices = @transform_4, window_bounds = array<i64: 1, 1, 32>}, {transform_indices = @transform_5, window_bounds = array<i64: 1, 1, 128>}]} {
    %c0 = arith.constant 0 : index
    %c0_0 = arith.constant 0 : index
    %0 = vector.load %arg1[%c0, %c0_0] : memref<32x16xf32, #tpu.memory_space<vmem>>, vector<32x16xf32>
    %c0_1 = arith.constant 0 : index
    %c0_2 = arith.constant 0 : index
    %1 = vector.load %arg2[%c0_1, %c0_2] : memref<128x16xf32, #tpu.memory_space<vmem>>, vector<128x16xf32>
    %c0_3 = arith.constant 0 : index
    %c0_4 = arith.constant 0 : index
    %2 = vector.load %arg3[%c0_3, %c0_4] : memref<1x128xf32, #tpu.memory_space<vmem>>, vector<1x128xf32>
    %3 = tpu.transpose %1, [1, 0] : vector<128x16xf32> -> vector<16x128xf32>
    %cst = arith.constant dense<0.000000e+00> : vector<32x128xf32>
    %4 = tpu.matmul %0, %3, %cst {dimension_numbers = #tpu.dot_dimension_numbers<[1], [0], [0], [1], [0, 0, 1, 1], [], []>} : vector<32x16xf32>, vector<16x128xf32>, vector<32x128xf32> -> vector<32x128xf32>
    %5 = vector.broadcast %2 : vector<1x128xf32> to vector<32x128xf32>
    %6 = arith.subf %5, %4 : vector<32x128xf32>
    %7 = tpu.reduce_index %6 {axis = 1 : i32, kind = #tpu.reduction_kind<arg_min>} : vector<32x128xf32> -> vector<32xi32>
    %8 = vector.shape_cast %7 : vector<32xi32> to vector<1x1x32xi32>
    %c0_5 = arith.constant 0 : index
    %c0_6 = arith.constant 0 : index
    %c0_7 = arith.constant 0 : index
    %9 = vector.load %arg5[%c0_5, %c0_6, %c0_7] : memref<1x1x32xi32, #tpu.memory_space<vmem>>, vector<1x1x32xi32>
    tpu.vector_store %arg5[%c0_5, %c0_6, %c0_7], %8 {strides = array<i32>} : memref<1x1x32xi32, #tpu.memory_space<vmem>>, vector<1x1x32xi32>,
    %10 = tpu.iota {dimensions = array<i32: 1>} : vector<1x128xi32>
    %11 = vector.shape_cast %7 : vector<32xi32> to vector<32x1xi32>
    %12 = vector.broadcast %10 : vector<1x128xi32> to vector<32x128xi32>
    %13 = vector.broadcast %11 : vector<32x1xi32> to vector<32x128xi32>
    %14 = arith.cmpi eq, %12, %13 : vector<32x128xi32>
    %15 = arith.extui %14 : vector<32x128xi1> to vector<32x128xi32>
    %16 = arith.sitofp %15 : vector<32x128xi32> to vector<32x128xf32>
    %cst_8 = arith.constant dense<0.000000e+00> : vector<32x16xf32>
    %17 = tpu.matmul %16, %1, %cst_8 {dimension_numbers = #tpu.dot_dimension_numbers<[1], [0], [0], [1], [0, 0, 1, 1], [], []>} : vector<32x128xf32>, vector<128x16xf32>, vector<32x16xf32> -> vector<32x16xf32>
    %c0_9 = arith.constant 0 : index
    %c0_10 = arith.constant 0 : index
    %18 = vector.load %arg4[%c0_9, %c0_10] : memref<32x16xf32, #tpu.memory_space<vmem>>, vector<32x16xf32>
    tpu.vector_store %arg4[%c0_9, %c0_10], %17 {strides = array<i32>} : memref<32x16xf32, #tpu.memory_space<vmem>>, vector<32x16xf32>,
    %19 = arith.subf %17, %0 : vector<32x16xf32>
    %20 = arith.mulf %19, %19 : vector<32x16xf32>
    %21 = vector.shape_cast %20 : vector<32x16xf32> to vector<1x32x16xf32>
    %cst_11 = arith.constant dense<0.000000e+00> : vector<1xf32>
    %22 = vector.multi_reduction <add>, %21, %cst_11 [1, 2] : vector<1x32x16xf32> to vector<1xf32>
    %23 = vector.shape_cast %22 : vector<1xf32> to vector<1x1x1xf32>
    %24 = vector.extract %23[0, 0, 0] : f32 from vector<1x1x1xf32>
    %25 = vector.broadcast %24 : f32 to vector<1x1x128xf32>
    %c0_12 = arith.constant 0 : index
    %c0_13 = arith.constant 0 : index
    %c0_14 = arith.constant 0 : index
    %26 = vector.load %arg6[%c0_12, %c0_13, %c0_14] : memref<1x1x128xf32, #tpu.memory_space<vmem>>, vector<1x1x128xf32>
    tpu.vector_store %arg6[%c0_12, %c0_13, %c0_14], %25 {strides = array<i32>} : memref<1x1x128xf32, #tpu.memory_space<vmem>>, vector<1x1x128xf32>,
    return
  }
  func.func @transform_0(%arg0: i32) -> (i32, i32) {
    %c0_i32 = arith.constant 0 : i32
    %c0_i32_0 = arith.constant 0 : i32
    return %arg0, %c0_i32 : i32, i32
  }
  func.func @transform_1(%arg0: i32) -> (i32, i32) {
    %c0_i32 = arith.constant 0 : i32
    %c0_i32_0 = arith.constant 0 : i32
    %c0_i32_1 = arith.constant 0 : i32
    return %c0_i32, %c0_i32_0 : i32, i32
  }
  func.func @transform_2(%arg0: i32) -> (i32, i32) {
    %c0_i32 = arith.constant 0 : i32
    %c0_i32_0 = arith.constant 0 : i32
    %c0_i32_1 = arith.constant 0 : i32
    return %c0_i32, %c0_i32_0 : i32, i32
  }
  func.func @transform_3(%arg0: i32) -> (i32, i32) {
    %c0_i32 = arith.constant 0 : i32
    %c0_i32_0 = arith.constant 0 : i32
    return %arg0, %c0_i32 : i32, i32
  }
  func.func @transform_4(%arg0: i32) -> (i32, i32, i32) {
    %c0_i32 = arith.constant 0 : i32
    %c0_i32_0 = arith.constant 0 : i32
    %c0_i32_1 = arith.constant 0 : i32
    return %arg0, %c0_i32, %c0_i32_0 : i32, i32, i32
  }
  func.func @transform_5(%arg0: i32) -> (i32, i32, i32) {
    %c0_i32 = arith.constant 0 : i32
    %c0_i32_0 = arith.constant 0 : i32
    %c0_i32_1 = arith.constant 0 : i32
    return %arg0, %c0_i32, %c0_i32_0 : i32, i32, i32
  }
}

</mosaic_0001>

<llo_original>
// kernel: tpu_custom_call.1
$region0: #{tpu_custom_call.1}
  #allocation0 [shape = 'u32[]', space=smem, size = 0x4, offset = 0x4, fixed_abs, tag = 'smem constant byte address 0x4 - core index']
  #allocation1 [shape = 'u32[144,128]{1,0:T(1,128)}', space=vmem, size = 0x12000, scoped, tag = 'internal scratch']
  %s0 = inlined_call_operand.vmem [shape: f32[32,16], index: 0, kind: input, shape index: {}]
  %s1 = inlined_call_operand.vmem [shape: f32[128,16], index: 1, kind: input, shape index: {}]
  %s2 = inlined_call_operand.vmem [shape: f32[1,128], index: 2, kind: input, shape index: {}]
  %s3 = inlined_call_operand.vmem [shape: f32[32,16], index: 3, kind: output, shape index: {0}]
  %s4 = inlined_call_operand.hbm [shape: s32[1,1,32], index: 4, kind: output, shape index: {1}]
  %s5 = inlined_call_operand.hbm [shape: f32[1,1,128], index: 5, kind: output, shape index: {2}]
  %6 = xla_tuple %s3, %s4, %s5
  %s7 = sld [smem:[#allocation0]]
  $region38: #{tpu_custom_call.1} parent=0
    _
  %s9 = ssub.s32 1, %s7
  %s10 = scalar_select 0, %s9, %s7
  $region1: #{tpu_custom_call.1} parent=0
    #allocation2 [shape = 'u8[512]{0}', space=vmem, size = 0x400, scoped, tag = 'output window, operand 1, single buffered']
    #allocation3 [shape = 's32[1]{0}', space=sflag, size = 0x4, scoped, tag = 'scoped memory for tpu_custom_call.1']
    #allocation4 [shape = 'u8[512]{0}', space=vmem, size = 0x400, scoped, tag = 'output window, operand 2, single buffered']
    #allocation5 [shape = 's32[1]{0}', space=sflag, size = 0x4, scoped, tag = 'scoped memory for tpu_custom_call.1']
    %11 = vsyncpa [#allocation3], 0
    %12 = vsyncpa [#allocation5], 0
    // Predicated region
    $region2: #{tpu_custom_call.1} parent=1 // pred_check
      _
    $region3: #{tpu_custom_call.1} parent=1 // pred_check_branch
      %14 = sbr.rel (0) target = $region5
    $region4: #{tpu_custom_call.1} parent=1 // pred_region
      _
    $region5: #{tpu_custom_call.1} parent=1 // pred_fallthru
      _
    // Predicated region
    $region6: #{tpu_custom_call.1} parent=1 // pred_check
      _
    $region7: #{tpu_custom_call.1} parent=1 // pred_check_branch
      %16 = sbr.rel (0) target = $region9
    $region8: #{tpu_custom_call.1} parent=1 // pred_region
      _
    $region9: #{tpu_custom_call.1} parent=1 // pred_fallthru
      _
    // Predicated region
    $region10: #{tpu_custom_call.1} parent=1 // pred_check
      _
    $region11: #{tpu_custom_call.1} parent=1 // pred_check_branch
      %18 = sbr.rel (0) target = $region13
    $region12: #{tpu_custom_call.1} parent=1 // pred_region
      _
    $region13: #{tpu_custom_call.1} parent=1 // pred_fallthru
      _
    %v19 = vld [vmem:[%s0] sm:$0xff]
    %v20 = vld [vmem:[%s0 + $0x8] sm:$0xff]
    %v21 = vld [vmem:[%s0 + $0x10] sm:$0xff]
    %v22 = vld [vmem:[%s0 + $0x18] sm:$0xff]
    %v23 = vld [vmem:[%s1] sm:$0xff]
    %v24 = vld [vmem:[%s1 + $0x8] sm:$0xff]
    %v25 = vld [vmem:[%s1 + $0x10] sm:$0xff]
    %v26 = vld [vmem:[%s1 + $0x18] sm:$0xff]
    %v27 = vld [vmem:[%s1 + $0x20] sm:$0xff]
    %v28 = vld [vmem:[%s1 + $0x28] sm:$0xff]
    %v29 = vld [vmem:[%s1 + $0x30] sm:$0xff]
    %v30 = vld [vmem:[%s1 + $0x38] sm:$0xff]
    %v31 = vld [vmem:[%s1 + $0x40] sm:$0xff]
    %v32 = vld [vmem:[%s1 + $0x48] sm:$0xff]
    %v33 = vld [vmem:[%s1 + $0x50] sm:$0xff]
    %v34 = vld [vmem:[%s1 + $0x58] sm:$0xff]
    %v35 = vld [vmem:[%s1 + $0x60] sm:$0xff]
    %v36 = vld [vmem:[%s1 + $0x68] sm:$0xff]
    %v37 = vld [vmem:[%s1 + $0x70] sm:$0xff]
    %v38 = vld [vmem:[%s1 + $0x78] sm:$0xff]
    %v39 = vld [vmem:[%s2] sm:$0x1]
    %vm40 = vcmask 130048
    %v42 = vsel %vm40, %v19, 0
    %v45 = vsel %vm40, %v20, 0
    %v48 = vsel %vm40, %v21, 0
    %v51 = vsel %vm40, %v22, 0
    %v54 = vsel %vm40, %v23, 0
    %v57 = vsel %vm40, %v24, 0
    %v60 = vsel %vm40, %v25, 0
    %v63 = vsel %vm40, %v26, 0
    %v66 = vsel %vm40, %v27, 0
    %v69 = vsel %vm40, %v28, 0
    %v72 = vsel %vm40, %v29, 0
    %v75 = vsel %vm40, %v30, 0
    %v78 = vsel %vm40, %v31, 0
    %v81 = vsel %vm40, %v32, 0
    %v84 = vsel %vm40, %v33, 0
    %v87 = vsel %vm40, %v34, 0
    %v90 = vsel %vm40, %v35, 0
    %v93 = vsel %vm40, %v36, 0
    %v96 = vsel %vm40, %v37, 0
    %v99 = vsel %vm40, %v38, 0
    %101 = vmatprep.subr.mxu0 0.0
    %102 = vmatpush1.xpose.msra.mxu0 %v54
    %103 = vmatprep.subr.mxu0 0.0
    %104 = vmatpush1.xpose.msra.mxu0 %v57
    %105 = vmatprep.subr.mxu0 0.0
    %106 = vmatpush1.xpose.msra.mxu0 %v60
    %107 = vmatprep.subr.mxu0 0.0
    %108 = vmatpush1.xpose.msra.mxu0 %v63
    %109 = vmatprep.subr.mxu0 0.0
    %110 = vmatpush1.xpose.msra.mxu0 %v66
    %111 = vmatprep.subr.mxu0 0.0
    %112 = vmatpush1.xpose.msra.mxu0 %v69
    %113 = vmatprep.subr.mxu0 0.0
    %114 = vmatpush1.xpose.msra.mxu0 %v72
    %115 = vmatprep.subr.mxu0 0.0
    %116 = vmatpush1.xpose.msra.mxu0 %v75
    %117 = vmatprep.subr.mxu0 0.0
    %118 = vmatpush1.xpose.msra.mxu0 %v78
    %119 = vmatprep.subr.mxu0 0.0
    %120 = vmatpush1.xpose.msra.mxu0 %v81
    %121 = vmatprep.subr.mxu0 0.0
    %122 = vmatpush1.xpose.msra.mxu0 %v84
    %123 = vmatprep.subr.mxu0 0.0
    %124 = vmatpush1.xpose.msra.mxu0 %v87
    %125 = vmatprep.subr.mxu0 0.0
    %126 = vmatpush1.xpose.msra.mxu0 %v90
    %127 = vmatprep.subr.mxu0 0.0
    %128 = vmatpush1.xpose.msra.mxu0 %v93
    %129 = vmatprep.subr.mxu0 0.0
    %130 = vmatpush1.xpose.msra.mxu0 %v96
    %131 = vmatprep.subr.mxu0 0.0
    %132 = vmatpush1.xpose.msra.mxu0 %v99
    %133 = vmatprep.subr.mxu0 0.0
    %134 = vmatpush1.xpose.msra.mxu0 0.0
    %135 = vmatprep.subr.mxu0 0.0
    %136 = vmatpush1.xpose.msra.mxu0 0.0
    %137 = vmatprep.subr.mxu0 0.0
    %138 = vmatpush1.xpose.msra.mxu0 0.0
    %139 = vmatprep.subr.mxu0 0.0
    %140 = vmatpush1.xpose.msra.mxu0 0.0
    %141 = vmatprep.subr.mxu0 0.0
    %142 = vmatpush1.xpose.msra.mxu0 0.0
    %143 = vmatprep.subr.mxu0 0.0
    %144 = vmatpush1.xpose.msra.mxu0 0.0
    %145 = vmatprep.subr.mxu0 0.0
    %146 = vmatpush1.xpose.msra.mxu0 0.0
    %147 = vmatprep.subr.mxu0 0.0
    %148 = vmatpush1.xpose.msra.mxu0 0.0
    %149 = vmatprep.subr.mxu0 0.0
    %150 = vmatpush1.xpose.msra.mxu0 0.0
    %151 = vmatprep.subr.mxu0 0.0
    %152 = vmatpush1.xpose.msra.mxu0 0.0
    %153 = vmatprep.subr.mxu0 0.0
    %154 = vmatpush1.xpose.msra.mxu0 0.0
    %155 = vmatprep.subr.mxu0 0.0
    %156 = vmatpush1.xpose.msra.mxu0 0.0
    %157 = vmatprep.subr.mxu0 0.0
    %158 = vmatpush1.xpose.msra.mxu0 0.0
    %159 = vmatprep.subr.mxu0 0.0
    %160 = vmatpush1.xpose.msra.mxu0 0.0
    %161 = vmatprep.subr.mxu0 0.0
    %162 = vmatpush1.xpose.msra.mxu0 0.0
    %163 = vmatprep.subr.mxu0 0.0
    %164 = vmatpush1.xpose.msra.mxu0 0.0
    %165 = vmatprep.mubr.f32.mxu0 0.0
    %166 = vmatmul.mubr.f32.gmra.mrb[0].mxu0 %v42
    %v167 = vpop.f32.mrb[0].mxu0
    %v168 = vadd.f32 0.0, %v167
    %v169 = vpop.f32.mrb[0].mxu0
    %170 = vmatprep.mubr.f32.mxu0 0.0
    %171 = vmatmul.mubr.f32.gmra.mrb[0].mxu0 %v45
    %v172 = vpop.f32.mrb[0].mxu0
    %v173 = vadd.f32 0.0, %v172
    %v174 = vpop.f32.mrb[0].mxu0
    %175 = vmatprep.mubr.f32.mxu0 0.0
    %176 = vmatmul.mubr.f32.gmra.mrb[0].mxu0 %v48
    %v177 = vpop.f32.mrb[0].mxu0
    %v178 = vadd.f32 0.0, %v177
    %v179 = vpop.f32.mrb[0].mxu0
    %180 = vmatprep.mubr.f32.mxu0 0.0
    %181 = vmatmul.mubr.f32.gmra.mrb[0].mxu0 %v51
    %v182 = vpop.f32.mrb[0].mxu0
    %v183 = vadd.f32 0.0, %v182
    %v184 = vpop.f32.mrb[0].mxu0
    %185 = vdwg.mxu0
    %v187 = vlaneseq
    %v188 = vshrl.u32 %v187, 7
    %v189 = vsub.s32 0, %v188
    %v190 = vrot.slane %v39, %v189
    %v192 = vsub.f32 %v190, %v168
    %v193 = vsub.f32 %v190, %v173
    %v194 = vsub.f32 %v190, %v178
    %v195 = vsub.f32 %v190, %v183
    %196 = vmin.index.xlane.f32.xlu0 %v192
    %v197 = vpop.xlane.xlu0 %196
    %198 = vmin.index.xlane.f32.xlu0 %v193
    %v199 = vpop.xlane.xlu0 %198
    %200 = vmin.index.xlane.f32.xlu0 %v194
    %v201 = vpop.xlane.xlu0 %200
    %202 = vmin.index.xlane.f32.xlu0 %v195
    %v203 = vpop.xlane.xlu0 %202
    %v204 = vlaneseq
    %v205 = vand.u32 %v204, 127
    %v206 = vlaneseq
    %v207 = vshrl.u32 %v206, 7
    %v208 = vsub.s32 %v205, %v207
    %v209 = vrot.slane %v197, %v208
    %v210 = vadd.s32 %v205, 4294967288
    %v211 = vlaneseq
    %v212 = vshrl.u32 %v211, 7
    %v213 = vsub.s32 %v210, %v212
    %v214 = vrot.slane %v199, %v213
    %vm215 = vcmask 130112
    %v216 = vsel %vm215, %v214, %v209
    %v217 = vadd.s32 %v205, 4294967280
    %v218 = vlaneseq
    %v219 = vshrl.u32 %v218, 7
    %v220 = vsub.s32 %v217, %v219
    %v221 = vrot.slane %v201, %v220
    %vm222 = vcmask 195712
    %v223 = vsel %vm222, %v221, %v216
    %v224 = vadd.s32 %v205, 4294967272
    %v225 = vlaneseq
    %v226 = vshrl.u32 %v225, 7
    %v227 = vsub.s32 %v224, %v226
    %v228 = vrot.slane %v203, %v227
    %vm229 = vcmask 261312
    %v230 = vsel %vm229, %v228, %v223
    %vm231 = vcmask 253952
    %232 = vst.msk [vmem:[#allocation2] sm:$0x1] %vm231, %v230
    %vm233 = vcmp.eq.s32.totalorder %v205, %v197
    %vm234 = vcmp.eq.s32.totalorder %v205, %v199
    %vm235 = vcmp.eq.s32.totalorder %v205, %v201
    %vm236 = vcmp.eq.s32.totalorder %v205, %v203
    %v237 = vsel %vm233, 1, 0
    %v238 = vsel %vm234, 1, 0
    %v239 = vsel %vm235, 1, 0
    %v240 = vsel %vm236, 1, 0
    %v241 = vcvt.s32.f32 %v237
    %v242 = vcvt.s32.f32 %v238
    %v243 = vcvt.s32.f32 %v239
    %v244 = vcvt.s32.f32 %v240
    %245 = vmatprep.subr.mxu0 0.0
    %246 = vmatpush1.msra.mxu0 %v23
    %247 = vmatprep.subr.mxu0 0.0
    %248 = vmatpush1.msra.mxu0 %v24
    %249 = vmatprep.subr.mxu0 0.0
    %250 = vmatpush1.msra.mxu0 %v25
    %251 = vmatprep.subr.mxu0 0.0
    %252 = vmatpush1.msra.mxu0 %v26
    %253 = vmatprep.subr.mxu0 0.0
    %254 = vmatpush1.msra.mxu0 %v27
    %255 = vmatprep.subr.mxu0 0.0
    %256 = vmatpush1.msra.mxu0 %v28
    %257 = vmatprep.subr.mxu0 0.0
    %258 = vmatpush1.msra.mxu0 %v29
    %259 = vmatprep.subr.mxu0 0.0
    %260 = vmatpush1.msra.mxu0 %v30
    %261 = vmatprep.subr.mxu0 0.0
    %262 = vmatpush1.msra.mxu0 %v31
    %263 = vmatprep.subr.mxu0 0.0
    %264 = vmatpush1.msra.mxu0 %v32
    %265 = vmatprep.subr.mxu0 0.0
    %266 = vmatpush1.msra.mxu0 %v33
    %267 = vmatprep.subr.mxu0 0.0
    %268 = vmatpush1.msra.mxu0 %v34
    %269 = vmatprep.subr.mxu0 0.0
    %270 = vmatpush1.msra.mxu0 %v35
    %271 = vmatprep.subr.mxu0 0.0
    %272 = vmatpush1.msra.mxu0 %v36
    %273 = vmatprep.subr.mxu0 0.0
    %274 = vmatpush1.msra.mxu0 %v37
    %275 = vmatprep.subr.mxu0 0.0
    %276 = vmatpush1.msra.mxu0 %v38
    %277 = vmatprep.subr.mxu0 0.0
    %278 = vmatpush1.msra.mxu0 0.0
    %279 = vmatprep.subr.mxu0 0.0
    %280 = vmatpush1.msra.mxu0 0.0
    %281 = vmatprep.subr.mxu0 0.0
    %282 = vmatpush1.msra.mxu0 0.0
    %283 = vmatprep.subr.mxu0 0.0
    %284 = vmatpush1.msra.mxu0 0.0
    %285 = vmatprep.subr.mxu0 0.0
    %286 = vmatpush1.msra.mxu0 0.0
    %287 = vmatprep.subr.mxu0 0.0
    %288 = vmatpush1.msra.mxu0 0.0
    %289 = vmatprep.subr.mxu0 0.0
    %290 = vmatpush1.msra.mxu0 0.0
    %291 = vmatprep.subr.mxu0 0.0
    %292 = vmatpush1.msra.mxu0 0.0
    %293 = vmatprep.subr.mxu0 0.0
    %294 = vmatpush1.msra.mxu0 0.0
    %295 = vmatprep.subr.mxu0 0.0
    %296 = vmatpush1.msra.mxu0 0.0
    %297 = vmatprep.subr.mxu0 0.0
    %298 = vmatpush1.msra.mxu0 0.0
    %299 = vmatprep.subr.mxu0 0.0
    %300 = vmatpush1.msra.mxu0 0.0
    %301 = vmatprep.subr.mxu0 0.0
    %302 = vmatpush1.msra.mxu0 0.0
    %303 = vmatprep.subr.mxu0 0.0
    %304 = vmatpush1.msra.mxu0 0.0
    %305 = vmatprep.subr.mxu0 0.0
    %306 = vmatpush1.msra.mxu0 0.0
    %307 = vmatprep.subr.mxu0 0.0
    %308 = vmatpush1.msra.mxu0 0.0
    %309 = vmatprep.mubr.f32.mxu0 0.0
    %310 = vmatmul.mubr.f32.gmra.mrb[0].mxu0 %v241
    %v311 = vpop.f32.mrb[0].mxu0
    %v312 = vadd.f32 0.0, %v311
    %v313 = vpop.f32.mrb[0].mxu0
    %314 = vmatprep.mubr.f32.mxu0 0.0
    %315 = vmatmul.mubr.f32.gmra.mrb[0].mxu0 %v242
    %v316 = vpop.f32.mrb[0].mxu0
    %v317 = vadd.f32 0.0, %v316
    %v318 = vpop.f32.mrb[0].mxu0
    %319 = vmatprep.mubr.f32.mxu0 0.0
    %320 = vmatmul.mubr.f32.gmra.mrb[0].mxu0 %v243
    %v321 = vpop.f32.mrb[0].mxu0
    %v322 = vadd.f32 0.0, %v321
    %v323 = vpop.f32.mrb[0].mxu0
    %324 = vmatprep.mubr.f32.mxu0 0.0
    %325 = vmatmul.mubr.f32.gmra.mrb[0].mxu0 %v244
    %v326 = vpop.f32.mrb[0].mxu0
    %v327 = vadd.f32 0.0, %v326
    %v328 = vpop.f32.mrb[0].mxu0
    %329 = vdwg.mxu0
    %330 = vst.msk [vmem:[%s3] sm:$0xff] %vm40, %v312
    %331 = vst.msk [vmem:[%s3 + $0x8] sm:$0xff] %vm40, %v317
    %332 = vst.msk [vmem:[%s3 + $0x10] sm:$0xff] %vm40, %v322
    %333 = vst.msk [vmem:[%s3 + $0x18] sm:$0xff] %vm40, %v327
    %v334 = vsub.f32 %v312, %v19
    %v335 = vsub.f32 %v317, %v20
    %v336 = vsub.f32 %v322, %v21
    %v337 = vsub.f32 %v327, %v22
    %v338 = vmul.f32 %v334, %v334
    %v339 = vmul.f32 %v335, %v335
    %v340 = vmul.f32 %v336, %v336
    %v341 = vmul.f32 %v337, %v337
    %v342 = vsel %vm40, %v338, 0.0
    %v343 = vsel %vm40, %v339, 0.0
    %v344 = vadd.f32 %v342, %v343
    %v345 = vsel %vm40, %v340, 0.0
    %v346 = vadd.f32 %v344, %v345
    %v347 = vsel %vm40, %v341, 0.0
    %v348 = vadd.f32 %v346, %v347
    %349 = vadd.xlane.f32.xlu0 %v348
    %v350 = vpop.xlane.xlu0 %349
    %v351 = vrot.slane %v350, 4
    %v352 = vadd.f32 %v350, %v351
    %v353 = vrot.slane %v352, 2
    %v354 = vadd.f32 %v352, %v353
    %v355 = vrot.slane %v354, 1
    %v356 = vadd.f32 %v354, %v355
    %s357 = vtos %v356
    %v358 = vstv %s357
    %359 = vst [vmem:[#allocation4] sm:$0x1] %v358
    // Predicated region
    $region14: #{tpu_custom_call.1} parent=1 // pred_check
      _
    $region15: #{tpu_custom_call.1} parent=1 // pred_check_branch
      %361 = sbr.rel (0) target = $region17
    $region16: #{tpu_custom_call.1} parent=1 // pred_region
      _
    $region17: #{tpu_custom_call.1} parent=1 // pred_fallthru
      _
    // Predicated region
    $region18: #{tpu_custom_call.1} parent=1 // pred_check
      _
    $region19: #{tpu_custom_call.1} parent=1 // pred_check_branch
      %363 = sbr.rel (0) target = $region21
    $region20: #{tpu_custom_call.1} parent=1 // pred_region
      %s365 = ssub.s32 16, 16
      %366 = vsyncadd [#allocation3], %s365
      %s368 = sshll.u32 [#allocation2], 4
      %s369 = int_to_ptr.vmem [resolvable:$true] %s368
      %371 = dma.vmem_to_hbm [thread:$0]  %s369, 16, %s4, [#allocation3]
    $region21: #{tpu_custom_call.1} parent=1 // pred_fallthru
      _
    // Predicated region
    $region22: #{tpu_custom_call.1} parent=1 // pred_check
      _
    $region23: #{tpu_custom_call.1} parent=1 // pred_check_branch
      %373 = sbr.rel (0) target = $region25
    $region24: #{tpu_custom_call.1} parent=1 // pred_region
      %s375 = ssub.s32 16, 16
      %376 = vsyncadd [#allocation5], %s375
      %s378 = sshll.u32 [#allocation4], 4
      %s379 = int_to_ptr.vmem [resolvable:$true] %s378
      %381 = dma.vmem_to_hbm [thread:$0]  %s379, 16, %s5, [#allocation5]
    $region25: #{tpu_custom_call.1} parent=1 // pred_fallthru
      _
    // Predicated region
    $region26: #{tpu_custom_call.1} parent=1 // pred_check
      _
    $region27: #{tpu_custom_call.1} parent=1 // pred_check_branch
      %383 = sbr.rel (0) target = $region29
    $region28: #{tpu_custom_call.1} parent=1 // pred_region
      _
    $region29: #{tpu_custom_call.1} parent=1 // pred_fallthru
      _
    // Predicated region
    $region30: #{tpu_custom_call.1} parent=1 // pred_check
      _
    $region31: #{tpu_custom_call.1} parent=1 // pred_check_branch
      %385 = sbr.rel (0) target = $region33
    $region32: #{tpu_custom_call.1} parent=1 // pred_region
      %386 = dma.done [#allocation3], 16
    $region33: #{tpu_custom_call.1} parent=1 // pred_fallthru
      _
    // Predicated region
    $region34: #{tpu_custom_call.1} parent=1 // pred_check
      _
    $region35: #{tpu_custom_call.1} parent=1 // pred_check_branch
      %388 = sbr.rel (0) target = $region37
    $region36: #{tpu_custom_call.1} parent=1 // pred_region
      %389 = dma.done [#allocation5], 16
    $region37: #{tpu_custom_call.1} parent=1 // pred_fallthru
      _
    %390 = vsyncpa [#allocation3], 1
    %391 = vsyncpa [#allocation5], 1

</llo_original>
